<compile_context>
chip_gen: v7x
topology: tpu7x:2x2x1
jax: 0.10.0
libtpu: 0.0.40
codegen_flags: <defaults>
</compile_context>

<pallas_src>
import jax
import jax.numpy as jnp
from jax.experimental import pallas as pl
from jax.experimental.pallas import tpu as pltpu


def _round_up(x, m):
    return ((x + m - 1) // m) * m


def _pad_to(x, shape):
    pads = [(0, s - d) for d, s in zip(x.shape, shape)]
    if all(p == (0, 0) for p in pads):
        return x
    return jnp.pad(x, pads)


def _type_head_kernel(x_ref, w1_ref, b1_ref, a_ref, w2_ref, b2_ref, o_ref):
    # First linear: [TN, Hp] @ [Hp, Hp]  (bf16 MXU, f32 accumulation)
    h = jnp.dot(x_ref[...], w1_ref[...], preferred_element_type=jnp.float32)
    h = h + b1_ref[...]
    # PReLU: alpha broadcast along rows; single VPU select per element.
    h = jnp.where(h >= 0.0, h, h * a_ref[...])
    # Second linear: [TN, Hp] @ [Hp, Tp]  (bf16 MXU, f32 accumulation)
    out = jnp.dot(h.astype(w2_ref.dtype), w2_ref[...],
                  preferred_element_type=jnp.float32)
    out = out + b2_ref[...]
    o_ref[...] = out.astype(o_ref.dtype)


def type_network_head(features, w1, b1, w2, b2, prelu_a,
                      *, tile_n=256, compute_dtype=jnp.bfloat16):
    """Fused Linear(H,H) -> PReLU -> Linear(H,T) head.

    features: [N, H] f32; w1: [H, H]; b1: [H]; w2: [H, T]; b2: [T];
    prelu_a: scalar (PyTorch PReLU default) or per-channel [H].
    Weights are stored [in, out] so the kernel does x @ W + b (== PyTorch x @ W.T).
    """
    n, h = features.shape
    t = w2.shape[1]

    # Lane-dense padding (multiples of 128 on the last dim of every matmul
    # operand / output) and sublane-aligned row tiles.
    h_pad = _round_up(h, 128)
    t_pad = _round_up(t, 128)
    n_tile = min(tile_n, _round_up(n, 8))
    n_pad = _round_up(n, n_tile)

    x = _pad_to(features, (n_pad, h_pad)).astype(compute_dtype)
    w1p = _pad_to(w1, (h_pad, h_pad)).astype(compute_dtype)
    w2p = _pad_to(w2, (h_pad, t_pad)).astype(compute_dtype)
    b1p = _pad_to(b1.reshape(1, h), (1, h_pad)).astype(jnp.float32)
    b2p = _pad_to(b2.reshape(1, t), (1, t_pad)).astype(jnp.float32)

    # PReLU alpha -> (1, h_pad) f32 row (handles scalar or per-channel alpha).
    a = jnp.asarray(prelu_a, jnp.float32).reshape(-1)
    a_row = jnp.broadcast_to(a, (h,)) if a.shape[0] == 1 else a
    a_pad = _pad_to(a_row.reshape(1, h), (1, h_pad)).astype(jnp.float32)

    grid = (n_pad // n_tile,)

    itemsize = jnp.dtype(compute_dtype).itemsize
    cost = pl.CostEstimate(
        flops=2 * n_pad * h_pad * (h_pad + t_pad),
        transcendentals=0,
        bytes_accessed=(n_pad * h_pad * itemsize          # features in
                        + h_pad * h_pad * itemsize        # w1
                        + h_pad * t_pad * itemsize        # w2
                        + (2 * h_pad + t_pad) * 4         # biases + alpha
                        + n_pad * t_pad * 4),             # output
    )

    out = pl.pallas_call(
        _type_head_kernel,
        out_shape=jax.ShapeDtypeStruct((n_pad, t_pad), jnp.float32),
        grid=grid,
        in_specs=[
            # Row tile of features: streamed / double-buffered over the grid.
            pl.BlockSpec((n_tile, h_pad), lambda i: (i, 0)),
            # Weights, biases, alpha: constant block index -> VMEM-resident.
            pl.BlockSpec((h_pad, h_pad), lambda i: (0, 0)),
            pl.BlockSpec((1, h_pad), lambda i: (0, 0)),
            pl.BlockSpec((1, h_pad), lambda i: (0, 0)),
            pl.BlockSpec((h_pad, t_pad), lambda i: (0, 0)),
            pl.BlockSpec((1, t_pad), lambda i: (0, 0)),
        ],
        out_specs=pl.BlockSpec((n_tile, t_pad), lambda i: (i, 0)),
        compiler_params=pltpu.CompilerParams(
            dimension_semantics=("parallel",),  # shard row tiles across TCs (v7x)
        ),
        cost_estimate=cost,
    )(x, w1p, b1p, a_pad, w2p, b2p)

    return out[:n, :t]


def reference_head(features, w1, b1, w2, b2, prelu_a,
                   compute_dtype=jnp.bfloat16):
    # Mirrors the kernel's bf16-input / f32-accumulate numerics.
    x = features.astype(compute_dtype)
    h = jnp.dot(x, w1.astype(compute_dtype),
                preferred_element_type=jnp.float32) + b1
    h = jnp.where(h >= 0.0, h, prelu_a * h)
    out = jnp.dot(h.astype(compute_dtype), w2.astype(compute_dtype),
                  preferred_element_type=jnp.float32) + b2
    return out


if __name__ == "__main__":
    # Small shapes consistent with the module (dim_hidden=512, dim_types=1000
    # in the original; scaled down here).
    N = 8     # number of graphs / samples
    H = 32    # dim_hidden
    T = 48    # dim_types

    key = jax.random.PRNGKey(0)
    k_feat, k_w1, k_b1, k_w2, k_b2 = jax.random.split(key, 5)

    # "features" stands in for the output of RBFMPNN (see TODO above).
    features = jax.random.normal(k_feat, (N, H), dtype=jnp.float32)

    lim1 = 1.0 / jnp.sqrt(H)
    w1 = jax.random.uniform(k_w1, (H, H), jnp.float32, -lim1, lim1)
    b1 = jax.random.uniform(k_b1, (H,), jnp.float32, -lim1, lim1)
    w2 = jax.random.uniform(k_w2, (H, T), jnp.float32, -lim1, lim1)
    b2 = jax.random.uniform(k_b2, (T,), jnp.float32, -lim1, lim1)
    prelu_a = 0.25  # PyTorch PReLU default init

    out = type_network_head(features, w1, b1, w2, b2, prelu_a)
    out = jax.block_until_ready(out)

    ref = reference_head(features, w1, b1, w2, b2, prelu_a)
    assert out.shape == (N, T)
    assert jnp.allclose(out, ref, atol=1e-2, rtol=5e-2), (
        float(jnp.max(jnp.abs(out - ref))))

    print("KERNEL_OK")
</pallas_src>

<mosaic_0001>
module attributes {stable_mosaic.version = 11 : i64} {
  func.func @_type_head_kernel(%arg0: i32, %arg1: memref<8x128xbf16, #tpu.memory_space<vmem>>, %arg2: memref<128x128xbf16, #tpu.memory_space<vmem>>, %arg3: memref<1x128xf32, #tpu.memory_space<vmem>>, %arg4: memref<1x128xf32, #tpu.memory_space<vmem>>, %arg5: memref<128x128xbf16, #tpu.memory_space<vmem>>, %arg6: memref<1x128xf32, #tpu.memory_space<vmem>>, %arg7: memref<8x128xf32, #tpu.memory_space<vmem>>) attributes {dimension_semantics = [#tpu.dimension_semantics<parallel>], iteration_bounds = array<i64: 1>, scalar_prefetch = 0 : i64, scratch_operands = 0 : i64, tpu.core_type = #tpu.core_type<tc>, window_params = [{transform_indices = @transform_0, window_bounds = array<i64: 8, 128>}, {pipeline_mode = #tpu.pipeline_mode<synchronous>, transform_indices = @transform_1, window_bounds = array<i64: 128, 128>}, {pipeline_mode = #tpu.pipeline_mode<synchronous>, transform_indices = @transform_2, window_bounds = array<i64: 1, 128>}, {pipeline_mode = #tpu.pipeline_mode<synchronous>, transform_indices = @transform_3, window_bounds = array<i64: 1, 128>}, {pipeline_mode = #tpu.pipeline_mode<synchronous>, transform_indices = @transform_4, window_bounds = array<i64: 128, 128>}, {pipeline_mode = #tpu.pipeline_mode<synchronous>, transform_indices = @transform_5, window_bounds = array<i64: 1, 128>}, {transform_indices = @transform_6, window_bounds = array<i64: 8, 128>}]} {
    %c0 = arith.constant 0 : index
    %c0_0 = arith.constant 0 : index
    %0 = vector.load %arg1[%c0, %c0_0] : memref<8x128xbf16, #tpu.memory_space<vmem>>, vector<8x128xbf16>
    %c0_1 = arith.constant 0 : index
    %c0_2 = arith.constant 0 : index
    %1 = vector.load %arg2[%c0_1, %c0_2] : memref<128x128xbf16, #tpu.memory_space<vmem>>, vector<128x128xbf16>
    %cst = arith.constant dense<0.000000e+00> : vector<8x128xf32>
    %2 = tpu.matmul %0, %1, %cst {dimension_numbers = #tpu.dot_dimension_numbers<[1], [0], [0], [1], [0, 0, 1, 1], [], []>} : vector<8x128xbf16>, vector<128x128xbf16>, vector<8x128xf32> -> vector<8x128xf32>
    %c0_3 = arith.constant 0 : index
    %c0_4 = arith.constant 0 : index
    %3 = vector.load %arg3[%c0_3, %c0_4] : memref<1x128xf32, #tpu.memory_space<vmem>>, vector<1x128xf32>
    %4 = vector.broadcast %3 : vector<1x128xf32> to vector<8x128xf32>
    %5 = arith.addf %2, %4 : vector<8x128xf32>
    %cst_5 = arith.constant 0.000000e+00 : f32
    %6 = vector.broadcast %cst_5 : f32 to vector<8x128xf32>
    %7 = arith.cmpf oge, %5, %6 : vector<8x128xf32>
    %c0_6 = arith.constant 0 : index
    %c0_7 = arith.constant 0 : index
    %8 = vector.load %arg4[%c0_6, %c0_7] : memref<1x128xf32, #tpu.memory_space<vmem>>, vector<1x128xf32>
    %9 = vector.broadcast %8 : vector<1x128xf32> to vector<8x128xf32>
    %10 = arith.mulf %5, %9 : vector<8x128xf32>
    %11 = arith.select %7, %5, %10 : vector<8x128xi1>, vector<8x128xf32>
    %12 = arith.truncf %11 : vector<8x128xf32> to vector<8x128xbf16>
    %c0_8 = arith.constant 0 : index
    %c0_9 = arith.constant 0 : index
    %13 = vector.load %arg5[%c0_8, %c0_9] : memref<128x128xbf16, #tpu.memory_space<vmem>>, vector<128x128xbf16>
    %cst_10 = arith.constant dense<0.000000e+00> : vector<8x128xf32>
    %14 = tpu.matmul %12, %13, %cst_10 {dimension_numbers = #tpu.dot_dimension_numbers<[1], [0], [0], [1], [0, 0, 1, 1], [], []>} : vector<8x128xbf16>, vector<128x128xbf16>, vector<8x128xf32> -> vector<8x128xf32>
    %c0_11 = arith.constant 0 : index
    %c0_12 = arith.constant 0 : index
    %15 = vector.load %arg6[%c0_11, %c0_12] : memref<1x128xf32, #tpu.memory_space<vmem>>, vector<1x128xf32>
    %16 = vector.broadcast %15 : vector<1x128xf32> to vector<8x128xf32>
    %17 = arith.addf %14, %16 : vector<8x128xf32>
    %c0_13 = arith.constant 0 : index
    %c0_14 = arith.constant 0 : index
    %18 = vector.load %arg7[%c0_13, %c0_14] : memref<8x128xf32, #tpu.memory_space<vmem>>, vector<8x128xf32>
    tpu.vector_store %arg7[%c0_13, %c0_14], %17 {strides = array<i32>} : memref<8x128xf32, #tpu.memory_space<vmem>>, vector<8x128xf32>,
    return
  }
  func.func @transform_0(%arg0: i32) -> (i32, i32) {
    %c0_i32 = arith.constant 0 : i32
    %c0_i32_0 = arith.constant 0 : i32
    return %arg0, %c0_i32 : i32, i32
  }
  func.func @transform_1(%arg0: i32) -> (i32, i32) {
    %c0_i32 = arith.constant 0 : i32
    %c0_i32_0 = arith.constant 0 : i32
    %c0_i32_1 = arith.constant 0 : i32
    return %c0_i32, %c0_i32_0 : i32, i32
  }
  func.func @transform_2(%arg0: i32) -> (i32, i32) {
    %c0_i32 = arith.constant 0 : i32
    %c0_i32_0 = arith.constant 0 : i32
    %c0_i32_1 = arith.constant 0 : i32
    return %c0_i32, %c0_i32_0 : i32, i32
  }
  func.func @transform_3(%arg0: i32) -> (i32, i32) {
    %c0_i32 = arith.constant 0 : i32
    %c0_i32_0 = arith.constant 0 : i32
    %c0_i32_1 = arith.constant 0 : i32
    return %c0_i32, %c0_i32_0 : i32, i32
  }
  func.func @transform_4(%arg0: i32) -> (i32, i32) {
    %c0_i32 = arith.constant 0 : i32
    %c0_i32_0 = arith.constant 0 : i32
    %c0_i32_1 = arith.constant 0 : i32
    return %c0_i32, %c0_i32_0 : i32, i32
  }
  func.func @transform_5(%arg0: i32) -> (i32, i32) {
    %c0_i32 = arith.constant 0 : i32
    %c0_i32_0 = arith.constant 0 : i32
    %c0_i32_1 = arith.constant 0 : i32
    return %c0_i32, %c0_i32_0 : i32, i32
  }
  func.func @transform_6(%arg0: i32) -> (i32, i32) {
    %c0_i32 = arith.constant 0 : i32
    %c0_i32_0 = arith.constant 0 : i32
    return %arg0, %c0_i32 : i32, i32
  }
}

</mosaic_0001>

<llo_original>
// kernel: tpu_custom_call.1
$region0: #{tpu_custom_call.1}
  #allocation0 [shape = 'u32[]', space=smem, size = 0x4, offset = 0x4, fixed_abs, tag = 'smem constant byte address 0x4 - core index']
  #allocation1 [shape = 'u32[144,128]{1,0:T(1,128)}', space=vmem, size = 0x12000, scoped, tag = 'internal scratch']
  %s0 = inlined_call_operand.hbm [shape: bf16[8,128], index: 0, kind: input, shape index: {}]
  %s1 = inlined_call_operand.hbm [shape: bf16[128,128], index: 1, kind: input, shape index: {}]
  %s2 = inlined_call_operand.vmem [shape: f32[1,128], index: 2, kind: input, shape index: {}]
  %s3 = inlined_call_operand.vmem [shape: f32[1,128], index: 3, kind: input, shape index: {}]
  %s4 = inlined_call_operand.hbm [shape: bf16[128,128], index: 4, kind: input, shape index: {}]
  %s5 = inlined_call_operand.vmem [shape: f32[1,128], index: 5, kind: input, shape index: {}]
  %s6 = inlined_call_operand.hbm [shape: f32[8,128], index: 6, kind: output, shape index: {}]
  %s7 = sld [smem:[#allocation0]]
  $region46: #{tpu_custom_call.1} parent=0
    _
  %s9 = ssub.s32 1, %s7
  %s10 = scalar_select 0, %s9, %s7
  $region1: #{tpu_custom_call.1} parent=0
    #allocation2 [shape = 'u8[2048]{0}', space=vmem, size = 0x800, scoped, tag = 'input window, operand 0, single buffered']
    #allocation3 [shape = 's32[1]{0}', space=sflag, size = 0x4, scoped, tag = 'scoped memory for tpu_custom_call.1']
    #allocation4 [shape = 's32[1]{0}', space=sflag, size = 0x4, scoped, tag = 'scoped memory for tpu_custom_call.1']
    #allocation5 [shape = 'u8[32768]{0}', space=vmem, size = 0x8000, scoped, tag = 'input window, operand 1, single buffered']
    #allocation6 [shape = 's32[1]{0}', space=sflag, size = 0x4, scoped, tag = 'scoped memory for tpu_custom_call.1']
    #allocation7 [shape = 'u8[32768]{0}', space=vmem, size = 0x8000, scoped, tag = 'input window, operand 4, single buffered']
    #allocation8 [shape = 'u8[4096]{0}', space=vmem, size = 0x1000, scoped, tag = 'output window, operand 0, single buffered']
    %11 = vsyncpa [#allocation3], 0
    %12 = vsyncpa [#allocation6], 0
    %13 = vsyncpa [#allocation4], 0
    // Predicated region
    $region2: #{tpu_custom_call.1} parent=1 // pred_check
      _
    $region3: #{tpu_custom_call.1} parent=1 // pred_check_branch
      %15 = sbr.rel (0) target = $region5
    $region4: #{tpu_custom_call.1} parent=1 // pred_region
      %s17 = ssub.s32 64, 64
      %18 = vsyncadd [#allocation3], %s17
      %s20 = sshll.u32 [#allocation2], 4
      %s21 = int_to_ptr.vmem [resolvable:$true] %s20
      %23 = dma.hbm_to_vmem [thread:$0]  %s0, 64, %s21, [#allocation3]
    $region5: #{tpu_custom_call.1} parent=1 // pred_fallthru
      _
    // Predicated region
    $region6: #{tpu_custom_call.1} parent=1 // pred_check
      _
    $region7: #{tpu_custom_call.1} parent=1 // pred_check_branch
      %25 = sbr.rel (0) target = $region9
    $region8: #{tpu_custom_call.1} parent=1 // pred_region
      %s27 = ssub.s32 1024, 1024
      %28 = vsyncadd [#allocation6], %s27
      %s29 = sshll.u32 [#allocation5], 4
      %s30 = int_to_ptr.vmem [resolvable:$true] %s29
      %35 = dma.hbm_to_vmem [thread:$0]  %s1, 1024, %s30, [#allocation6], 64, 64, 4
    $region9: #{tpu_custom_call.1} parent=1 // pred_fallthru
      _
    // Predicated region
    $region10: #{tpu_custom_call.1} parent=1 // pred_check
      _
    $region11: #{tpu_custom_call.1} parent=1 // pred_check_branch
      %37 = sbr.rel (0) target = $region13
    $region12: #{tpu_custom_call.1} parent=1 // pred_region
      _
    $region13: #{tpu_custom_call.1} parent=1 // pred_fallthru
      _
    // Predicated region
    $region14: #{tpu_custom_call.1} parent=1 // pred_check
      _
    $region15: #{tpu_custom_call.1} parent=1 // pred_check_branch
      %39 = sbr.rel (0) target = $region17
    $region16: #{tpu_custom_call.1} parent=1 // pred_region
      _
    $region17: #{tpu_custom_call.1} parent=1 // pred_fallthru
      _
    // Predicated region
    $region18: #{tpu_custom_call.1} parent=1 // pred_check
      _
    $region19: #{tpu_custom_call.1} parent=1 // pred_check_branch
      %41 = sbr.rel (0) target = $region21
    $region20: #{tpu_custom_call.1} parent=1 // pred_region
      %s43 = ssub.s32 1024, 1024
      %44 = vsyncadd [#allocation6], %s43
      %s45 = sshll.u32 [#allocation7], 4
      %s46 = int_to_ptr.vmem [resolvable:$true] %s45
      %51 = dma.hbm_to_vmem [thread:$0]  %s4, 1024, %s46, [#allocation6], 64, 64, 4
    $region21: #{tpu_custom_call.1} parent=1 // pred_fallthru
      _
    // Predicated region
    $region22: #{tpu_custom_call.1} parent=1 // pred_check
      _
    $region23: #{tpu_custom_call.1} parent=1 // pred_check_branch
      %53 = sbr.rel (0) target = $region25
    $region24: #{tpu_custom_call.1} parent=1 // pred_region
      _
    $region25: #{tpu_custom_call.1} parent=1 // pred_fallthru
      _
    // Predicated region
    $region26: #{tpu_custom_call.1} parent=1 // pred_check
      _
    $region27: #{tpu_custom_call.1} parent=1 // pred_check_branch
      %55 = sbr.rel (0) target = $region29
    $region28: #{tpu_custom_call.1} parent=1 // pred_region
      %56 = dma.done [#allocation3], 64
    $region29: #{tpu_custom_call.1} parent=1 // pred_fallthru
      _
    // Predicated region
    $region30: #{tpu_custom_call.1} parent=1 // pred_check
      _
    $region31: #{tpu_custom_call.1} parent=1 // pred_check_branch
      %58 = sbr.rel (0) target = $region33
    $region32: #{tpu_custom_call.1} parent=1 // pred_region
      %59 = dma.done [#allocation6], 1024
    $region33: #{tpu_custom_call.1} parent=1 // pred_fallthru
      _
    // Predicated region
    $region34: #{tpu_custom_call.1} parent=1 // pred_check
      _
    $region35: #{tpu_custom_call.1} parent=1 // pred_check_branch
      %61 = sbr.rel (0) target = $region37
    $region36: #{tpu_custom_call.1} parent=1 // pred_region
      %62 = dma.done [#allocation6], 1024
    $region37: #{tpu_custom_call.1} parent=1 // pred_fallthru
      _
    %v64 = vld [vmem:[#allocation2] sm:$0xf]
    %v65 = vld [vmem:[#allocation5] sm:$0xf]
    %v66 = vld [vmem:[#allocation5 + $0x4] sm:$0xf]
    %v67 = vld [vmem:[#allocation5 + $0x8] sm:$0xf]
    %v68 = vld [vmem:[#allocation5 + $0xc] sm:$0xf]
    %v69 = vld [vmem:[#allocation5 + $0x10] sm:$0xf]
    %v70 = vld [vmem:[#allocation5 + $0x14] sm:$0xf]
    %v71 = vld [vmem:[#allocation5 + $0x18] sm:$0xf]
    %v72 = vld [vmem:[#allocation5 + $0x1c] sm:$0xf]
    %v73 = vld [vmem:[#allocation5 + $0x20] sm:$0xf]
    %v74 = vld [vmem:[#allocation5 + $0x24] sm:$0xf]
    %v75 = vld [vmem:[#allocation5 + $0x28] sm:$0xf]
    %v76 = vld [vmem:[#allocation5 + $0x2c] sm:$0xf]
    %v77 = vld [vmem:[#allocation5 + $0x30] sm:$0xf]
    %v78 = vld [vmem:[#allocation5 + $0x34] sm:$0xf]
    %v79 = vld [vmem:[#allocation5 + $0x38] sm:$0xf]
    %v80 = vld [vmem:[#allocation5 + $0x3c] sm:$0xf]
    %v81 = vld [vmem:[%s2] sm:$0x1]
    %v83 = vlaneseq
    %v84 = vshrl.u32 %v83, 7
    %v85 = vsub.s32 0, %v84
    %v86 = vrot.slane %v81, %v85
    %v104 = vunpack.c.l.b16 %v65
    %v105 = vunpack.c.l.b16 %v66
    %v106 = vunpack.c.l.b16 %v67
    %v107 = vunpack.c.l.b16 %v68
    %v108 = vunpack.c.l.b16 %v69
    %v109 = vunpack.c.l.b16 %v70
    %v110 = vunpack.c.l.b16 %v71
    %v111 = vunpack.c.l.b16 %v72
    %v112 = vunpack.c.l.b16 %v73
    %v113 = vunpack.c.l.b16 %v74
    %v114 = vunpack.c.l.b16 %v75
    %v115 = vunpack.c.l.b16 %v76
    %v116 = vunpack.c.l.b16 %v77
    %v117 = vunpack.c.l.b16 %v78
    %v118 = vunpack.c.l.b16 %v79
    %v119 = vunpack.c.l.b16 %v80
    %v120 = vpack.c.b16 %v105, %v104
    %v121 = vpack.c.b16 %v107, %v106
    %v122 = vpack.c.b16 %v109, %v108
    %v123 = vpack.c.b16 %v111, %v110
    %v124 = vpack.c.b16 %v113, %v112
    %v125 = vpack.c.b16 %v115, %v114
    %v126 = vpack.c.b16 %v117, %v116
    %v127 = vpack.c.b16 %v119, %v118
    %136 = vmatprep.subr.bf16.mxu0 0
    %137 = vmatpush1.bf16.msra.mxu0 %v120
    %138 = vmatprep.subr.bf16.mxu0 0
    %139 = vmatpush1.bf16.msra.mxu0 %v121
    %140 = vmatprep.subr.bf16.mxu0 0
    %141 = vmatpush1.bf16.msra.mxu0 %v122
    %142 = vmatprep.subr.bf16.mxu0 0
    %143 = vmatpush1.bf16.msra.mxu0 %v123
    %144 = vmatprep.subr.bf16.mxu0 0
    %145 = vmatpush1.bf16.msra.mxu0 %v124
    %146 = vmatprep.subr.bf16.mxu0 0
    %147 = vmatpush1.bf16.msra.mxu0 %v125
    %148 = vmatprep.subr.bf16.mxu0 0
    %149 = vmatpush1.bf16.msra.mxu0 %v126
    %150 = vmatprep.subr.bf16.mxu0 0
    %151 = vmatpush1.bf16.msra.mxu0 %v127
    %152 = vmatprep.subr.bf16.mxu0 0
    %153 = vmatpush1.bf16.msra.mxu0 0
    %154 = vmatprep.subr.bf16.mxu0 0
    %155 = vmatpush1.bf16.msra.mxu0 0
    %156 = vmatprep.subr.bf16.mxu0 0
    %157 = vmatpush1.bf16.msra.mxu0 0
    %158 = vmatprep.subr.bf16.mxu0 0
    %159 = vmatpush1.bf16.msra.mxu0 0
    %160 = vmatprep.subr.bf16.mxu0 0
    %161 = vmatpush1.bf16.msra.mxu0 0
    %162 = vmatprep.subr.bf16.mxu0 0
    %163 = vmatpush1.bf16.msra.mxu0 0
    %164 = vmatprep.subr.bf16.mxu0 0
    %165 = vmatpush1.bf16.msra.mxu0 0
    %166 = vmatprep.subr.bf16.mxu0 0
    %167 = vmatpush1.bf16.msra.mxu0 0
    %168 = vmatprep.mubr.bf16.mxu0 0
    %169 = vmatmul.mubr.bf16.gmra.mrb[0].mxu0 %v64
    %v170 = vpop.f32.mrb[0].mxu0
    %v171 = vadd.f32 %v86, %v170
    %v172 = vpop.f32.mrb[0].mxu0
    %v173 = vpop.f32.mrb[0].mxu0
    %v174 = vpop.f32.mrb[0].mxu0
    %175 = vdwg.mxu0
    %vm176 = vcmp.ge.f32.partialorder %v171, 0.0
    %v177 = vld [vmem:[%s3] sm:$0x1]
    %v179 = vlaneseq
    %v180 = vshrl.u32 %v179, 7
    %v181 = vsub.s32 0, %v180
    %v182 = vrot.slane %v177, %v181
    %v184 = vmul.f32 %v171, %v182
    %v185 = vsel %vm176, %v171, %v184
    %v186 = vpack.c.bf16 %v185, %v185
    %v187 = vld [vmem:[#allocation7] sm:$0xf]
    %v188 = vld [vmem:[#allocation7 + $0x4] sm:$0xf]
    %v189 = vld [vmem:[#allocation7 + $0x8] sm:$0xf]
    %v190 = vld [vmem:[#allocation7 + $0xc] sm:$0xf]
    %v191 = vld [vmem:[#allocation7 + $0x10] sm:$0xf]
    %v192 = vld [vmem:[#allocation7 + $0x14] sm:$0xf]
    %v193 = vld [vmem:[#allocation7 + $0x18] sm:$0xf]
    %v194 = vld [vmem:[#allocation7 + $0x1c] sm:$0xf]
    %v195 = vld [vmem:[#allocation7 + $0x20] sm:$0xf]
    %v196 = vld [vmem:[#allocation7 + $0x24] sm:$0xf]
    %v197 = vld [vmem:[#allocation7 + $0x28] sm:$0xf]
    %v198 = vld [vmem:[#allocation7 + $0x2c] sm:$0xf]
    %v199 = vld [vmem:[#allocation7 + $0x30] sm:$0xf]
    %v200 = vld [vmem:[#allocation7 + $0x34] sm:$0xf]
    %v201 = vld [vmem:[#allocation7 + $0x38] sm:$0xf]
    %v202 = vld [vmem:[#allocation7 + $0x3c] sm:$0xf]
    %v203 = vld [vmem:[%s5] sm:$0x1]
    %v205 = vlaneseq
    %v206 = vshrl.u32 %v205, 7
    %v207 = vsub.s32 0, %v206
    %v208 = vrot.slane %v203, %v207
    %v226 = vunpack.c.l.b16 %v187
    %v227 = vunpack.c.l.b16 %v188
    %v228 = vunpack.c.l.b16 %v189
    %v229 = vunpack.c.l.b16 %v190
    %v230 = vunpack.c.l.b16 %v191
    %v231 = vunpack.c.l.b16 %v192
    %v232 = vunpack.c.l.b16 %v193
    %v233 = vunpack.c.l.b16 %v194
    %v234 = vunpack.c.l.b16 %v195
    %v235 = vunpack.c.l.b16 %v196
    %v236 = vunpack.c.l.b16 %v197
    %v237 = vunpack.c.l.b16 %v198
    %v238 = vunpack.c.l.b16 %v199
    %v239 = vunpack.c.l.b16 %v200
    %v240 = vunpack.c.l.b16 %v201
    %v241 = vunpack.c.l.b16 %v202
    %v242 = vpack.c.b16 %v227, %v226
    %v243 = vpack.c.b16 %v229, %v228
    %v244 = vpack.c.b16 %v231, %v230
    %v245 = vpack.c.b16 %v233, %v232
    %v246 = vpack.c.b16 %v235, %v234
    %v247 = vpack.c.b16 %v237, %v236
    %v248 = vpack.c.b16 %v239, %v238
    %v249 = vpack.c.b16 %v241, %v240
    %258 = vmatprep.subr.bf16.mxu0 0
    %259 = vmatpush1.bf16.msra.mxu0 %v242
    %260 = vmatprep.subr.bf16.mxu0 0
    %261 = vmatpush1.bf16.msra.mxu0 %v243
    %262 = vmatprep.subr.bf16.mxu0 0
    %263 = vmatpush1.bf16.msra.mxu0 %v244
    %264 = vmatprep.subr.bf16.mxu0 0
    %265 = vmatpush1.bf16.msra.mxu0 %v245
    %266 = vmatprep.subr.bf16.mxu0 0
    %267 = vmatpush1.bf16.msra.mxu0 %v246
    %268 = vmatprep.subr.bf16.mxu0 0
    %269 = vmatpush1.bf16.msra.mxu0 %v247
    %270 = vmatprep.subr.bf16.mxu0 0
    %271 = vmatpush1.bf16.msra.mxu0 %v248
    %272 = vmatprep.subr.bf16.mxu0 0
    %273 = vmatpush1.bf16.msra.mxu0 %v249
    %274 = vmatprep.subr.bf16.mxu0 0
    %275 = vmatpush1.bf16.msra.mxu0 0
    %276 = vmatprep.subr.bf16.mxu0 0
    %277 = vmatpush1.bf16.msra.mxu0 0
    %278 = vmatprep.subr.bf16.mxu0 0
    %279 = vmatpush1.bf16.msra.mxu0 0
    %280 = vmatprep.subr.bf16.mxu0 0
    %281 = vmatpush1.bf16.msra.mxu0 0
    %282 = vmatprep.subr.bf16.mxu0 0
    %283 = vmatpush1.bf16.msra.mxu0 0
    %284 = vmatprep.subr.bf16.mxu0 0
    %285 = vmatpush1.bf16.msra.mxu0 0
    %286 = vmatprep.subr.bf16.mxu0 0
    %287 = vmatpush1.bf16.msra.mxu0 0
    %288 = vmatprep.subr.bf16.mxu0 0
    %289 = vmatpush1.bf16.msra.mxu0 0
    %290 = vmatprep.mubr.bf16.mxu0 0
    %291 = vmatmul.mubr.bf16.gmra.mrb[0].mxu0 %v186
    %v292 = vpop.f32.mrb[0].mxu0
    %v293 = vadd.f32 %v208, %v292
    %v294 = vpop.f32.mrb[0].mxu0
    %v295 = vpop.f32.mrb[0].mxu0
    %v296 = vpop.f32.mrb[0].mxu0
    %297 = vdwg.mxu0
    %298 = vst [vmem:[#allocation8] sm:$0xff] %v293
    // Predicated region
    $region38: #{tpu_custom_call.1} parent=1 // pred_check
      _
    $region39: #{tpu_custom_call.1} parent=1 // pred_check_branch
      %300 = sbr.rel (0) target = $region41
    $region40: #{tpu_custom_call.1} parent=1 // pred_region
      %s302 = ssub.s32 128, 128
      %303 = vsyncadd [#allocation4], %s302
      %s305 = sshll.u32 [#allocation8], 4
      %s306 = int_to_ptr.vmem [resolvable:$true] %s305
      %308 = dma.vmem_to_hbm [thread:$0]  %s306, 128, %s6, [#allocation4]
    $region41: #{tpu_custom_call.1} parent=1 // pred_fallthru
      _
    // Predicated region
    $region42: #{tpu_custom_call.1} parent=1 // pred_check
      _
    $region43: #{tpu_custom_call.1} parent=1 // pred_check_branch
      %310 = sbr.rel (0) target = $region45
    $region44: #{tpu_custom_call.1} parent=1 // pred_region
      %311 = dma.done [#allocation4], 128
    $region45: #{tpu_custom_call.1} parent=1 // pred_fallthru
      _
    %312 = vsyncpa [#allocation3], 1
    %313 = vsyncpa [#allocation6], 1
    %314 = vsyncpa [#allocation4], 1

</llo_original>
